<compile_context>
chip_gen: v6e
topology: v6e:2x2x1
jax: 0.10.0
libtpu: 0.0.40
codegen_flags: <defaults>
</compile_context>

<pallas_src>
import functools

import jax
import jax.numpy as jnp
from jax.experimental import pallas as pl
from jax.experimental.pallas import tpu as pltpu

MARGIN = 1.25
_LANES = 128
_ROW_ALIGN = 32          # int8 sublane tile; also a multiple of the f32 tile (8)
_MAX_BLOCK_ROWS = 1024   # ~0.5 MiB f32 + 0.125 MiB int8 per block per buffer


def _contrastive_loss_kernel(d_ref, l_ref, out_ref, acc_ref, *, inv_n, margin):
    i = pl.program_id(0)

    @pl.when(i == 0)
    def _init():
        acc_ref[...] = jnp.zeros_like(acc_ref)

    d = d_ref[...]                                  # (block_rows, 128) f32
    lab = l_ref[...].astype(jnp.float32)            # int8 {0,1} -> f32

    similar = (1.0 - lab) * d * d
    clamped = jnp.maximum(margin - d, 0.0)
    dissimilar = lab * clamped * clamped
    loss = similar + dissimilar                     # (block_rows, 128)

    # Fold the block's row-groups into the (8, 128) accumulator: a pure
    # view-reshape plus vreg adds (VPU), no per-block XLU reduction.
    acc_ref[...] += loss.reshape(-1, 8, _LANES).sum(axis=0)

    @pl.when(i == pl.num_programs(0) - 1)
    def _finalize():
        out_ref[0, 0] = jnp.sum(acc_ref[...]) * jnp.float32(inv_n)


def contrastive_loss(euclidean_distance, label, margin=MARGIN):
    """Pallas TPU implementation of ContrastiveLoss.forward.

    Args:
      euclidean_distance: float array, any shape (flattened internally).
      label: binary {0, 1} array (any numeric dtype), same number of elements.

    Returns:
      scalar float32 loss.
    """
    d = jnp.asarray(euclidean_distance, jnp.float32).reshape(-1)
    # Labels are binary {0,1}; ship as int8 to cut HBM traffic 4x, widen in-kernel.
    lab = jnp.asarray(label).reshape(-1).astype(jnp.int8)
    n = d.shape[0]

    rows_needed = max(1, pl.cdiv(n, _LANES))
    rows_min = pl.cdiv(rows_needed, _ROW_ALIGN) * _ROW_ALIGN
    block_rows = min(_MAX_BLOCK_ROWS, rows_min)
    rows = pl.cdiv(rows_min, block_rows) * block_rows
    padded = rows * _LANES

    # Single pad per array; padded zeros contribute zero loss, so no mask.
    d_p = jnp.pad(d, (0, padded - n)).reshape(rows, _LANES)
    l_p = jnp.pad(lab, (0, padded - n)).reshape(rows, _LANES)

    num_blocks = rows // block_rows
    inv_n = 1.0 / float(n)

    kernel = functools.partial(
        _contrastive_loss_kernel, inv_n=inv_n, margin=float(margin)
    )

    out = pl.pallas_call(
        kernel,
        out_shape=jax.ShapeDtypeStruct((1, 1), jnp.float32),
        grid=(num_blocks,),
        in_specs=[
            pl.BlockSpec((block_rows, _LANES), lambda i: (i, 0)),
            pl.BlockSpec((block_rows, _LANES), lambda i: (i, 0)),
        ],
        # Whole (1,1) scalar output resident in SMEM across the grid.
        out_specs=pl.BlockSpec(memory_space=pltpu.SMEM),
        scratch_shapes=[pltpu.VMEM((8, _LANES), jnp.float32)],
        compiler_params=pltpu.CompilerParams(
            dimension_semantics=("arbitrary",),
        ),
        cost_estimate=pl.CostEstimate(
            flops=8 * padded,
            transcendentals=0,
            bytes_accessed=padded * 4 + padded * 1 + 4,
        ),
    )(d_p, l_p)

    return out[0, 0]


def _reference(euclidean_distance, label, margin=MARGIN):
    d = jnp.asarray(euclidean_distance, jnp.float32)
    lab = jnp.asarray(label, jnp.float32)
    return jnp.mean(
        (1.0 - lab) * d**2 + lab * jnp.maximum(margin - d, 0.0) ** 2
    )


if __name__ == "__main__":
    key = jax.random.PRNGKey(0)
    k1, k2 = jax.random.split(key)

    batch = 8  # pairwise distances for a batch of 8 pairs
    euclidean_distance = jax.random.uniform(
        k1, (batch,), dtype=jnp.float32, minval=0.0, maxval=2.0
    )
    label = jax.random.bernoulli(k2, 0.5, (batch,)).astype(jnp.int32)

    loss = contrastive_loss(euclidean_distance, label)
    loss = jax.block_until_ready(loss)

    ref = _reference(euclidean_distance, label)
    assert jnp.allclose(loss, ref, rtol=1e-5, atol=1e-6), (loss, ref)

    print("KERNEL_OK")
</pallas_src>

<mosaic_0001>
module attributes {stable_mosaic.version = 11 : i64} {
  func.func @_contrastive_loss_kernel(%arg0: i32, %arg1: memref<32x128xf32, #tpu.memory_space<vmem>>, %arg2: memref<32x128xi8, #tpu.memory_space<vmem>>, %arg3: memref<1x1xf32, #tpu.memory_space<smem>>, %arg4: memref<8x128xf32, #tpu.memory_space<vmem>>) attributes {dimension_semantics = [#tpu.dimension_semantics<arbitrary>], iteration_bounds = array<i64: 1>, scalar_prefetch = 0 : i64, scratch_operands = 1 : i64, tpu.core_type = #tpu.core_type<tc>, window_params = [{transform_indices = @transform_0, window_bounds = array<i64: 32, 128>}, {transform_indices = @transform_1, window_bounds = array<i64: 32, 128>}, {transform_indices = @transform_2, window_bounds = array<i64: 1, 1>}]} {
    %c0_i32 = arith.constant 0 : i32
    %0 = arith.cmpi eq, %arg0, %c0_i32 : i32
    %1 = arith.extui %0 : i1 to i32
    %c0_i32_0 = arith.constant 0 : i32
    %2 = arith.cmpi ne, %1, %c0_i32_0 : i32
    scf.if %2 {
      %cst_13 = arith.constant 0.000000e+00 : f32
      %25 = vector.broadcast %cst_13 : f32 to vector<8x128xf32>
      %c0_14 = arith.constant 0 : index
      %c0_15 = arith.constant 0 : index
      %26 = vector.load %arg4[%c0_14, %c0_15] : memref<8x128xf32, #tpu.memory_space<vmem>>, vector<8x128xf32>
      tpu.vector_store %arg4[%c0_14, %c0_15], %25 {strides = array<i32>} : memref<8x128xf32, #tpu.memory_space<vmem>>, vector<8x128xf32>,
    } else {
    }
    %c0 = arith.constant 0 : index
    %c0_1 = arith.constant 0 : index
    %3 = vector.load %arg1[%c0, %c0_1] : memref<32x128xf32, #tpu.memory_space<vmem>>, vector<32x128xf32>
    %c0_2 = arith.constant 0 : index
    %c0_3 = arith.constant 0 : index
    %4 = vector.load %arg2[%c0_2, %c0_3] : memref<32x128xi8, #tpu.memory_space<vmem>>, vector<32x128xi8>
    %5 = arith.sitofp %4 : vector<32x128xi8> to vector<32x128xf32>
    %cst = arith.constant 1.000000e+00 : f32
    %6 = vector.broadcast %cst : f32 to vector<32x128xf32>
    %7 = arith.subf %6, %5 : vector<32x128xf32>
    %8 = arith.mulf %7, %3 : vector<32x128xf32>
    %9 = arith.mulf %8, %3 : vector<32x128xf32>
    %cst_4 = arith.constant 1.250000e+00 : f32
    %10 = vector.broadcast %cst_4 : f32 to vector<32x128xf32>
    %11 = arith.subf %10, %3 : vector<32x128xf32>
    %cst_5 = arith.constant 0.000000e+00 : f32
    %12 = vector.broadcast %cst_5 : f32 to vector<32x128xf32>
    %13 = arith.maximumf %11, %12 : vector<32x128xf32>
    %14 = arith.mulf %5, %13 : vector<32x128xf32>
    %15 = arith.mulf %14, %13 : vector<32x128xf32>
    %16 = arith.addf %9, %15 : vector<32x128xf32>
    %c0_6 = arith.constant 0 : index
    %c0_7 = arith.constant 0 : index
    %17 = vector.load %arg4[%c0_6, %c0_7] : memref<8x128xf32, #tpu.memory_space<vmem>>, vector<8x128xf32>
    %18 = vector.shape_cast %16 : vector<32x128xf32> to vector<4x8x128xf32>
    %cst_8 = arith.constant dense<0.000000e+00> : vector<8x128xf32>
    %19 = vector.multi_reduction <add>, %18, %cst_8 [0] : vector<4x8x128xf32> to vector<8x128xf32>
    %20 = arith.addf %17, %19 : vector<8x128xf32>
    %c0_9 = arith.constant 0 : index
    %c0_10 = arith.constant 0 : index
    %21 = vector.load %arg4[%c0_9, %c0_10] : memref<8x128xf32, #tpu.memory_space<vmem>>, vector<8x128xf32>
    tpu.vector_store %arg4[%c0_9, %c0_10], %20 {strides = array<i32>} : memref<8x128xf32, #tpu.memory_space<vmem>>, vector<8x128xf32>,
    %c0_i32_11 = arith.constant 0 : i32
    %22 = arith.cmpi eq, %arg0, %c0_i32_11 : i32
    %23 = arith.extui %22 : i1 to i32
    %c0_i32_12 = arith.constant 0 : i32
    %24 = arith.cmpi ne, %23, %c0_i32_12 : i32
    scf.if %24 {
      %c0_13 = arith.constant 0 : index
      %c0_14 = arith.constant 0 : index
      %25 = vector.load %arg4[%c0_13, %c0_14] : memref<8x128xf32, #tpu.memory_space<vmem>>, vector<8x128xf32>
      %26 = vector.shape_cast %25 : vector<8x128xf32> to vector<1x8x128xf32>
      %cst_15 = arith.constant dense<0.000000e+00> : vector<1xf32>
      %27 = vector.multi_reduction <add>, %26, %cst_15 [1, 2] : vector<1x8x128xf32> to vector<1xf32>
      %28 = vector.shape_cast %27 : vector<1xf32> to vector<1x1x1xf32>
      %29 = vector.extract %28[0, 0, 0] : f32 from vector<1x1x1xf32>
      %cst_16 = arith.constant 1.250000e-01 : f32
      %30 = arith.mulf %29, %cst_16 : f32
      %c0_17 = arith.constant 0 : index
      %c0_18 = arith.constant 0 : index
      %31 = memref.load %arg3[%c0_17, %c0_18] : memref<1x1xf32, #tpu.memory_space<smem>>
      memref.store %30, %arg3[%c0_17, %c0_18] : memref<1x1xf32, #tpu.memory_space<smem>>
    } else {
    }
    return
  }
  func.func @transform_0(%arg0: i32) -> (i32, i32) {
    %c0_i32 = arith.constant 0 : i32
    %c0_i32_0 = arith.constant 0 : i32
    return %arg0, %c0_i32 : i32, i32
  }
  func.func @transform_1(%arg0: i32) -> (i32, i32) {
    %c0_i32 = arith.constant 0 : i32
    %c0_i32_0 = arith.constant 0 : i32
    return %arg0, %c0_i32 : i32, i32
  }
  func.func @transform_2(%arg0: i32) -> (i32, i32) {
    %c0_i32 = arith.constant 0 : i32
    %c0_i32_0 = arith.constant 0 : i32
    %c0_i32_1 = arith.constant 0 : i32
    return %c0_i32, %c0_i32_0 : i32, i32
  }
}

</mosaic_0001>

<llo_original>
// kernel: tpu_custom_call.1
$region0: #{tpu_custom_call.1}
  #allocation0 [shape = 'u32[]', space=smem, size = 0x4, offset = 0x4, fixed_abs, tag = 'smem constant byte address 0x4 - core index']
  #allocation1 [shape = 'u32[144,128]{1,0:T(1,128)}', space=vmem, size = 0x12000, scoped, tag = 'internal scratch']
  #allocation2 [shape = 'f32[8,128]{1,0:T(8,128)}', space=vmem, size = 0x1000, scoped, tag = 'scratch operand']
  %s0 = inlined_call_operand.hbm [shape: f32[32,128], index: 0, kind: input, shape index: {}]
  %s1 = inlined_call_operand.hbm [shape: s8[32,128], index: 1, kind: input, shape index: {}]
  %s2 = inlined_call_operand.hbm [shape: f32[1,1], index: 2, kind: output, shape index: {}]
  %s3 = sld [smem:[#allocation0]]
  $region34: #{tpu_custom_call.1} parent=0
    _
  %s5 = ssub.s32 1, %s3
  %s6 = scalar_select 0, %s5, %s3
  $region1: #{tpu_custom_call.1} parent=0
    #allocation3 [shape = 'u8[16384]{0}', space=vmem, size = 0x4000, scoped, tag = 'input window, operand 0, single buffered']
    #allocation4 [shape = 's32[1]{0}', space=sflag, size = 0x4, scoped, tag = 'scoped memory for tpu_custom_call.1']
    #allocation5 [shape = 's32[1]{0}', space=sflag, size = 0x4, scoped, tag = 'scoped memory for tpu_custom_call.1']
    #allocation6 [shape = 'u8[4096]{0}', space=vmem, size = 0x1000, scoped, tag = 'input window, operand 1, single buffered']
    #allocation7 [shape = 's32[1]{0}', space=sflag, size = 0x4, scoped, tag = 'scoped memory for tpu_custom_call.1']
    #allocation8 [shape = 'u8[512]{0}', space=smem, size = 0x200, scoped, tag = 'output window, operand 0, single buffered']
    %7 = vsyncpa [#allocation4], 0
    %8 = vsyncpa [#allocation7], 0
    %9 = vsyncpa [#allocation5], 0
    // Predicated region
    $region2: #{tpu_custom_call.1} parent=1 // pred_check
      _
    $region3: #{tpu_custom_call.1} parent=1 // pred_check_branch
      %11 = sbr.rel (0) target = $region5
    $region4: #{tpu_custom_call.1} parent=1 // pred_region
      %s13 = ssub.s32 512, 512
      %14 = vsyncadd [#allocation4], %s13
      %s15 = sshll.u32 [#allocation3], 4
      %s16 = int_to_ptr.vmem [resolvable:$true] %s15
      %21 = dma.hbm_to_vmem [thread:$0]  %s0, 512, %s16, [#allocation4], 128, 128, 8
    $region5: #{tpu_custom_call.1} parent=1 // pred_fallthru
      _
    // Predicated region
    $region6: #{tpu_custom_call.1} parent=1 // pred_check
      _
    $region7: #{tpu_custom_call.1} parent=1 // pred_check_branch
      %23 = sbr.rel (0) target = $region9
    $region8: #{tpu_custom_call.1} parent=1 // pred_region
      %s25 = ssub.s32 128, 128
      %26 = vsyncadd [#allocation7], %s25
      %s28 = sshll.u32 [#allocation6], 4
      %s29 = int_to_ptr.vmem [resolvable:$true] %s28
      %31 = dma.hbm_to_vmem [thread:$0]  %s1, 128, %s29, [#allocation7]
    $region9: #{tpu_custom_call.1} parent=1 // pred_fallthru
      _
    // Predicated region
    $region10: #{tpu_custom_call.1} parent=1 // pred_check
      _
    $region11: #{tpu_custom_call.1} parent=1 // pred_check_branch
      %33 = sbr.rel (0) target = $region13
    $region12: #{tpu_custom_call.1} parent=1 // pred_region
      %34 = dma.done [#allocation4], 512
    $region13: #{tpu_custom_call.1} parent=1 // pred_fallthru
      _
    // Predicated region
    $region14: #{tpu_custom_call.1} parent=1 // pred_check
      _
    $region15: #{tpu_custom_call.1} parent=1 // pred_check_branch
      %36 = sbr.rel (0) target = $region17
    $region16: #{tpu_custom_call.1} parent=1 // pred_region
      %37 = dma.done [#allocation7], 128
    $region17: #{tpu_custom_call.1} parent=1 // pred_fallthru
      _
    %p38 = scmp.eq.s32.totalorder 0, 0
    // Predicated region
    $region18: #{tpu_custom_call.1} parent=1 // pred_check
      %p39 = pneg %p38
    $region19: #{tpu_custom_call.1} parent=1 // pred_check_branch
      %41 = sbr.rel (%p39) target = $region21
    $region20: #{tpu_custom_call.1} parent=1 // pred_region
      %42 = vst [vmem:[#allocation2] sm:$0xff] 0.0
    $region21: #{tpu_custom_call.1} parent=1 // pred_fallthru
      _
    %v43 = vld [vmem:[#allocation3] sm:$0xff]
    %v44 = vld [vmem:[#allocation3 + $0x8] sm:$0xff]
    %v45 = vld [vmem:[#allocation3 + $0x10] sm:$0xff]
    %v46 = vld [vmem:[#allocation3 + $0x18] sm:$0xff]
    %v47 = vld [vmem:[#allocation6] sm:$0xff]
    %v48 = vunpack.c.0.s8 %v47
    %v49 = vunpack.c.1.s8 %v47
    %v50 = vunpack.c.2.s8 %v47
    %v51 = vunpack.c.3.s8 %v47
    %v52 = vcvt.s32.f32 %v48
    %v53 = vcvt.s32.f32 %v49
    %v54 = vcvt.s32.f32 %v50
    %v55 = vcvt.s32.f32 %v51
    %v56 = vsub.f32 1.0, %v52
    %v57 = vsub.f32 1.0, %v53
    %v58 = vsub.f32 1.0, %v54
    %v59 = vsub.f32 1.0, %v55
    %v60 = vmul.f32 %v56, %v43
    %v61 = vmul.f32 %v57, %v44
    %v62 = vmul.f32 %v58, %v45
    %v63 = vmul.f32 %v59, %v46
    %v64 = vmul.f32 %v60, %v43
    %v65 = vmul.f32 %v61, %v44
    %v66 = vmul.f32 %v62, %v45
    %v67 = vmul.f32 %v63, %v46
    %v68 = vsub.f32 1.25, %v43
    %v69 = vsub.f32 1.25, %v44
    %v70 = vsub.f32 1.25, %v45
    %v71 = vsub.f32 1.25, %v46
    %v72 = vmax.f32 %v68, 0.0
    %v73 = vmax.f32 %v69, 0.0
    %v74 = vmax.f32 %v70, 0.0
    %v75 = vmax.f32 %v71, 0.0
    %v76 = vmul.f32 %v52, %v72
    %v77 = vmul.f32 %v53, %v73
    %v78 = vmul.f32 %v54, %v74
    %v79 = vmul.f32 %v55, %v75
    %v80 = vmul.f32 %v76, %v72
    %v81 = vmul.f32 %v77, %v73
    %v82 = vmul.f32 %v78, %v74
    %v83 = vmul.f32 %v79, %v75
    %v84 = vadd.f32 %v64, %v80
    %v85 = vadd.f32 %v65, %v81
    %v86 = vadd.f32 %v66, %v82
    %v87 = vadd.f32 %v67, %v83
    %v88 = vld [vmem:[#allocation2] sm:$0xff]
    %v89 = vadd.f32 %v84, %v85
    %v90 = vadd.f32 %v89, %v86
    %v91 = vadd.f32 %v90, %v87
    %v92 = vadd.f32 %v88, %v91
    %93 = vst [vmem:[#allocation2] sm:$0xff] %v92
    // Predicated region
    $region22: #{tpu_custom_call.1} parent=1 // pred_check
      %p94 = pneg %p38
    $region23: #{tpu_custom_call.1} parent=1 // pred_check_branch
      %96 = sbr.rel (%p94) target = $region25
    $region24: #{tpu_custom_call.1} parent=1 // pred_region
      %v97 = vld [vmem:[#allocation2] sm:$0xff]
      %98 = vadd.xlane.f32.xlu0 %v97
      %v99 = vpop.xlane.xlu0 %98
      %v100 = vrot.slane %v99, 4
      %v101 = vadd.f32 %v99, %v100
      %v102 = vrot.slane %v101, 2
      %v103 = vadd.f32 %v101, %v102
      %v104 = vrot.slane %v103, 1
      %v105 = vadd.f32 %v103, %v104
      %s106 = vtos %v105
      %s107 = smul.f32 %s106, 0.125
      %s108 = scalar_lea.smem [#allocation8], 0
      %109 = sst [smem:[%s108]] %s107
    $region25: #{tpu_custom_call.1} parent=1 // pred_fallthru
      _
    // Predicated region
    $region26: #{tpu_custom_call.1} parent=1 // pred_check
      _
    $region27: #{tpu_custom_call.1} parent=1 // pred_check_branch
      %111 = sbr.rel (0) target = $region29
    $region28: #{tpu_custom_call.1} parent=1 // pred_region
      %s113 = ssub.s32 16, 16
      %114 = vsyncadd [#allocation5], %s113
      %117 = dma.smem_to_hbm [#allocation8], 16, %s2, [#allocation5]
    $region29: #{tpu_custom_call.1} parent=1 // pred_fallthru
      _
    // Predicated region
    $region30: #{tpu_custom_call.1} parent=1 // pred_check
      _
    $region31: #{tpu_custom_call.1} parent=1 // pred_check_branch
      %119 = sbr.rel (0) target = $region33
    $region32: #{tpu_custom_call.1} parent=1 // pred_region
      %120 = dma.done [#allocation5], 16
    $region33: #{tpu_custom_call.1} parent=1 // pred_fallthru
      _
    %121 = sfence
    %122 = vsyncpa [#allocation4], 1
    %123 = vsyncpa [#allocation7], 1
    %124 = vsyncpa [#allocation5], 1

</llo_original>
